<compile_context>
chip_gen: v7x
topology: tpu7x:2x2x1
jax: 0.10.0
libtpu: 0.0.40
codegen_flags: <defaults>
</compile_context>

<pallas_src>
import jax
import jax.numpy as jnp
from jax.experimental import pallas as pl
from jax.experimental.pallas import tpu as pltpu


def _copy_kernel(x_ref, o_ref):
    # Pass-through of the current (tile_r, C) block.
    o_ref[...] = x_ref[...]


def _sublane_multiple(dtype) -> int:
    """Preferred second-to-last-dim tiling multiple for the packed dtype."""
    itemsize = jnp.dtype(dtype).itemsize
    return {4: 8, 2: 16, 1: 32}.get(itemsize, 8)


def pallas_identity(
    x: jax.Array,
    *,
    target_tile_bytes: int = 4 * 1024 * 1024,   # ~4 MiB per buffer
    vmem_limit_bytes: int = 32 * 1024 * 1024,   # safe on v5e/v6e/v7x
) -> jax.Array:
    """Identity forward as a tiled, lane-dense Pallas TPU copy kernel."""
    assert x.ndim == 2, "expected 2-D (rows, cols) input"
    R, C = x.shape
    itemsize = jnp.dtype(x.dtype).itemsize
    sub = _sublane_multiple(x.dtype)

    # Full-row (lane-dense) blocks; pick tile_r as the largest sublane
    # multiple whose block fits the per-buffer budget.  Double-buffered
    # in + out => 4 * target_tile_bytes of VMEM, well under the limit.
    row_bytes = max(C * itemsize, 1)
    max_rows = max(1, target_tile_bytes // row_bytes)
    tile_r = max(sub, (max_rows // sub) * sub)
    if tile_r >= R:
        tile_r = R  # full-extent block: valid even if R is not a sublane multiple

    grid = (pl.cdiv(R, tile_r),)

    return pl.pallas_call(
        _copy_kernel,
        out_shape=jax.ShapeDtypeStruct((R, C), x.dtype),
        grid=grid,
        in_specs=[pl.BlockSpec((tile_r, C), lambda i: (i, 0))],
        out_specs=pl.BlockSpec((tile_r, C), lambda i: (i, 0)),
        input_output_aliases={0: 0},
        compiler_params=pltpu.CompilerParams(
            dimension_semantics=("parallel",),
            vmem_limit_bytes=vmem_limit_bytes,
        ),
    )(x)


class Model:
    """JAX/Pallas analogue of the abstract PyTorch `Model` base class."""

    def __init__(self):
        # The reference __init__ defines no parameters.
        pass

    def forward(self, *args, **kwargs):
        # TODO(synk): reference forward is abstract — no concrete math to translate.
        raise NotImplementedError("Subclasses should implement this method")


class IdentityModel(Model):
    """Minimal concrete subclass: forward is an identity Pallas kernel."""

    def forward(self, x: jax.Array) -> jax.Array:
        return pallas_identity(x)


if __name__ == "__main__":
    key = jax.random.PRNGKey(0)
    model = IdentityModel()

    # --- primary test: jit + donation so input_output_aliases truly aliases ---
    shape, dtype = (64, 256), jnp.float32
    x = jax.random.normal(key, shape, dtype=dtype)
    expected = jax.random.normal(key, shape, dtype=dtype)  # same key -> same values
    fwd = jax.jit(model.forward, donate_argnums=0)
    y = fwd(x)
    jax.block_until_ready(y)
    assert y.shape == shape and y.dtype == dtype
    assert bool(jnp.allclose(y, expected)), "identity kernel mismatch (f32)"

    # --- ragged / non-128-multiple shape via cdiv + full-extent blocks ---
    key2 = jax.random.PRNGKey(0)
    xr = jax.random.normal(key2, (10, 96), dtype=jnp.float32)
    yr = model.forward(xr)
    jax.block_until_ready(yr)
    assert bool(jnp.allclose(yr, xr)), "identity kernel mismatch (ragged)"

    # --- multi-block grid path with a small forced tile budget, bf16 packing ---
    key3 = jax.random.PRNGKey(0)
    xb = jax.random.normal(key3, (64, 256), dtype=jnp.bfloat16)
    yb = pallas_identity(xb, target_tile_bytes=16 * 1024)  # grid > 1 block
    jax.block_until_ready(yb)
    assert bool(jnp.allclose(yb.astype(jnp.float32), xb.astype(jnp.float32)))

    print("KERNEL_OK")
</pallas_src>

<mosaic_0001>
module attributes {stable_mosaic.version = 11 : i64} {
  func.func @_copy_kernel(%arg0: i32, %arg1: memref<64x256xf32, #tpu.memory_space<vmem>>, %arg2: memref<64x256xf32, #tpu.memory_space<vmem>>) attributes {dimension_semantics = [#tpu.dimension_semantics<parallel>], iteration_bounds = array<i64: 1>, scalar_prefetch = 0 : i64, scratch_operands = 0 : i64, tpu.core_type = #tpu.core_type<tc>, window_params = [{transform_indices = @transform_0, window_bounds = array<i64: 64, 256>}, {transform_indices = @transform_1, window_bounds = array<i64: 64, 256>}]} {
    %c0 = arith.constant 0 : index
    %c0_0 = arith.constant 0 : index
    %0 = vector.load %arg1[%c0, %c0_0] : memref<64x256xf32, #tpu.memory_space<vmem>>, vector<64x256xf32>
    %c0_1 = arith.constant 0 : index
    %c0_2 = arith.constant 0 : index
    %1 = vector.load %arg2[%c0_1, %c0_2] : memref<64x256xf32, #tpu.memory_space<vmem>>, vector<64x256xf32>
    tpu.vector_store %arg2[%c0_1, %c0_2], %0 {strides = array<i32>} : memref<64x256xf32, #tpu.memory_space<vmem>>, vector<64x256xf32>,
    return
  }
  func.func @transform_0(%arg0: i32) -> (i32, i32) {
    %c0_i32 = arith.constant 0 : i32
    %c0_i32_0 = arith.constant 0 : i32
    return %arg0, %c0_i32 : i32, i32
  }
  func.func @transform_1(%arg0: i32) -> (i32, i32) {
    %c0_i32 = arith.constant 0 : i32
    %c0_i32_0 = arith.constant 0 : i32
    return %arg0, %c0_i32 : i32, i32
  }
}

</mosaic_0001>

<llo_original>
// kernel: forward.1
$region0: #{forward.1}
  #allocation0 [shape = 'u32[]', space=smem, size = 0x4, offset = 0x4, fixed_abs, tag = 'smem constant byte address 0x4 - core index']
  #allocation1 [shape = 'u32[144,128]{1,0:T(1,128)}', space=vmem, size = 0x12000, scoped, tag = 'internal scratch']
  %s0 = inlined_call_operand.hbm [shape: f32[64,256], index: 0, kind: input, shape index: {}, may-alias: {0,1}]
  %s1 = inlined_call_operand.hbm [shape: f32[64,256], index: 1, kind: output, shape index: {}, may-alias: {0,1}]
  %s2 = sld [smem:[#allocation0]]
  $region18: #{forward.1} parent=0
    _
  %s4 = ssub.s32 1, %s2
  %s5 = scalar_select 0, %s4, %s2
  $region1: #{forward.1} parent=0
    #allocation2 [shape = 'u8[65536]{0}', space=vmem, size = 0x10000, scoped, tag = 'input window, operand 0, single buffered']
    #allocation3 [shape = 's32[1]{0}', space=sflag, size = 0x4, scoped, tag = 'scoped memory for forward.1']
    #allocation4 [shape = 's32[1]{0}', space=sflag, size = 0x4, scoped, tag = 'scoped memory for forward.1']
    #allocation5 [shape = 'u8[65536]{0}', space=vmem, size = 0x10000, scoped, tag = 'output window, operand 0, single buffered']
    %6 = vsyncpa [#allocation3], 0
    %7 = vsyncpa [#allocation4], 0
    // Predicated region
    $region2: #{forward.1} parent=1 // pred_check
      _
    $region3: #{forward.1} parent=1 // pred_check_branch
      %9 = sbr.rel (0) target = $region5
    $region4: #{forward.1} parent=1 // pred_region
      %s11 = ssub.s32 2048, 2048
      %12 = vsyncadd [#allocation3], %s11
      %s13 = sshll.u32 [#allocation2], 4
      %s14 = int_to_ptr.vmem [resolvable:$true] %s13
      %19 = dma.hbm_to_vmem [thread:$0]  %s0, 2048, %s14, [#allocation3], 256, 256, 16
    $region5: #{forward.1} parent=1 // pred_fallthru
      _
    // Predicated region
    $region6: #{forward.1} parent=1 // pred_check
      _
    $region7: #{forward.1} parent=1 // pred_check_branch
      %21 = sbr.rel (0) target = $region9
    $region8: #{forward.1} parent=1 // pred_region
      %22 = dma.done [#allocation3], 2048
    $region9: #{forward.1} parent=1 // pred_fallthru
      _
    %v23 = vld [vmem:[#allocation2] sm:$0xff]
    %v24 = vld [vmem:[#allocation2 + $0x8] sm:$0xff]
    %v25 = vld [vmem:[#allocation2 + $0x10] sm:$0xff]
    %v26 = vld [vmem:[#allocation2 + $0x18] sm:$0xff]
    %v27 = vld [vmem:[#allocation2 + $0x20] sm:$0xff]
    %v28 = vld [vmem:[#allocation2 + $0x28] sm:$0xff]
    %v29 = vld [vmem:[#allocation2 + $0x30] sm:$0xff]
    %v30 = vld [vmem:[#allocation2 + $0x38] sm:$0xff]
    %v31 = vld [vmem:[#allocation2 + $0x40] sm:$0xff]
    %v32 = vld [vmem:[#allocation2 + $0x48] sm:$0xff]
    %v33 = vld [vmem:[#allocation2 + $0x50] sm:$0xff]
    %v34 = vld [vmem:[#allocation2 + $0x58] sm:$0xff]
    %v35 = vld [vmem:[#allocation2 + $0x60] sm:$0xff]
    %v36 = vld [vmem:[#allocation2 + $0x68] sm:$0xff]
    %v37 = vld [vmem:[#allocation2 + $0x70] sm:$0xff]
    %v38 = vld [vmem:[#allocation2 + $0x78] sm:$0xff]
    %39 = vst [vmem:[#allocation5] sm:$0xff] %v23
    %40 = vst [vmem:[#allocation5 + $0x8] sm:$0xff] %v24
    %41 = vst [vmem:[#allocation5 + $0x10] sm:$0xff] %v25
    %42 = vst [vmem:[#allocation5 + $0x18] sm:$0xff] %v26
    %43 = vst [vmem:[#allocation5 + $0x20] sm:$0xff] %v27
    %44 = vst [vmem:[#allocation5 + $0x28] sm:$0xff] %v28
    %45 = vst [vmem:[#allocation5 + $0x30] sm:$0xff] %v29
    %46 = vst [vmem:[#allocation5 + $0x38] sm:$0xff] %v30
    %47 = vst [vmem:[#allocation5 + $0x40] sm:$0xff] %v31
    %48 = vst [vmem:[#allocation5 + $0x48] sm:$0xff] %v32
    %49 = vst [vmem:[#allocation5 + $0x50] sm:$0xff] %v33
    %50 = vst [vmem:[#allocation5 + $0x58] sm:$0xff] %v34
    %51 = vst [vmem:[#allocation5 + $0x60] sm:$0xff] %v35
    %52 = vst [vmem:[#allocation5 + $0x68] sm:$0xff] %v36
    %53 = vst [vmem:[#allocation5 + $0x70] sm:$0xff] %v37
    %54 = vst [vmem:[#allocation5 + $0x78] sm:$0xff] %v38
    // Predicated region
    $region10: #{forward.1} parent=1 // pred_check
      _
    $region11: #{forward.1} parent=1 // pred_check_branch
      %56 = sbr.rel (0) target = $region13
    $region12: #{forward.1} parent=1 // pred_region
      %s58 = ssub.s32 2048, 2048
      %59 = vsyncadd [#allocation4], %s58
      %s60 = sshll.u32 [#allocation5], 4
      %s61 = int_to_ptr.vmem [resolvable:$true] %s60
      %66 = dma.vmem_to_hbm [thread:$0]  %s61, 2048, %s1, [#allocation4], 256, 256, 16
    $region13: #{forward.1} parent=1 // pred_fallthru
      _
    // Predicated region
    $region14: #{forward.1} parent=1 // pred_check
      _
    $region15: #{forward.1} parent=1 // pred_check_branch
      %68 = sbr.rel (0) target = $region17
    $region16: #{forward.1} parent=1 // pred_region
      %69 = dma.done [#allocation4], 2048
    $region17: #{forward.1} parent=1 // pred_fallthru
      _
    %70 = vsyncpa [#allocation3], 1
    %71 = vsyncpa [#allocation4], 1

</llo_original>
